<compile_context>
chip_gen: v6e
topology: v6e:2x2x1
jax: 0.10.0
libtpu: 0.0.40
codegen_flags: <defaults>
</compile_context>

<pallas_src>
import functools

import jax
import jax.numpy as jnp
from jax import lax
from jax.experimental import pallas as pl
from jax.experimental.pallas import tpu as pltpu


def _round_up(x, m):
    return ((x + m - 1) // m) * m


def _cdiv(a, b):
    return -(-a // b)


def _vmem_limit_bytes():
    """Chip-aware scoped-VMEM limit: ~half of physical VMEM, capped at 64 MiB.

    v5e/v6e (128 MiB physical) -> 64 MiB scoped; v7x (64 MiB) -> 32 MiB.
    """
    cap = 128 << 20
    try:
        info = pltpu.get_tpu_info()
        cap = int(getattr(info, "vmem_capacity_bytes", cap))
    except Exception:  # off-TPU tracing / older runtimes: stay conservative.
        cap = 64 << 20
    return min(cap // 2, 64 << 20)


def _pick_tile_b(b, h, l, *, with_labels, budget_bytes, max_tile=2048):
    """Largest batch tile (multiple of 8, <= max_tile) whose double-buffered
    pipelined streams plus the double-buffered resident weight/bias fit in
    `budget_bytes` of VMEM."""
    b_cap = max(8, _round_up(min(b, max_tile), 8))
    # f32 bytes per batch row across pipelined streams:
    #   x in (H) + sig out (H) + label out (L) [+ labels in (L)]
    per_row_bytes = 4 * (2 * h + (3 if with_labels else 2) * l)
    resident_bytes = 2 * 4 * (h * l + l)            # weight + bias, double-buffered
    avail = budget_bytes - resident_bytes
    if avail <= 2 * 8 * per_row_bytes:
        return 8
    by_budget = (avail // (2 * per_row_bytes)) // 8 * 8
    return int(max(8, min(b_cap, by_budget)))


def _fused_loss_kernel(x_ref, w_ref, b_ref, y_ref,
                       label_ref, sig_ref, partial_ref,
                       *, tile_b, n_rows):
    """sigmoid + (sig @ W + b) + row-masked BCE-with-logits partial sum."""
    i = pl.program_id(0)

    sig = jax.nn.sigmoid(x_ref[...])
    sig_ref[...] = sig

    z = jnp.dot(sig, w_ref[...], preferred_element_type=jnp.float32) + b_ref[...]
    label_ref[...] = z

    # Numerically stable BCE-with-logits (matches torch.nn.BCEWithLogitsLoss).
    y = y_ref[...]
    per = jnp.maximum(z, 0.0) - z * y + jnp.log1p(jnp.exp(-jnp.abs(z)))

    # Mask garbage rows of the boundary tile (non-divisible batch).
    row = lax.broadcasted_iota(jnp.int32, per.shape, 0) + i * tile_b
    masked = jnp.where(row < n_rows, per, 0.0)
    ts = jnp.sum(masked)                                   # scalar per tile

    partial_ref[...] = jnp.full(partial_ref.shape, ts, dtype=jnp.float32)


def _fused_kernel(x_ref, w_ref, b_ref, label_ref, sig_ref):
    """sigmoid + (sig @ W + b), batch-tiled, no loss (labels is None)."""
    sig = jax.nn.sigmoid(x_ref[...])
    sig_ref[...] = sig
    label_ref[...] = (jnp.dot(sig, w_ref[...],
                              preferred_element_type=jnp.float32) + b_ref[...])


def ptmf_linear_forward(logits, weight_t, bias, labels=None, ier_layer=None,
                        *, max_tile_b=2048):
    """JAX/Pallas equivalent of PTMFlinear.forward (post-irl_model part).

    Args:
      logits:   [B, H] float32 — third output of irl_model.
      weight_t: [H, L] float32 — label_classifier weight, transposed.
      bias:     [L]    float32 — label_classifier bias.
      labels:   optional [B, L] float32 multi-hot labels.
      ier_layer: opaque passthrough (returned unchanged).

    Returns: (loss, ier_layer, label_logits, sig_logits)
    """
    B, H = logits.shape
    L = weight_t.shape[1]

    vmem_limit = _vmem_limit_bytes()
    picker_budget = (vmem_limit * 3) // 4            # headroom for Mosaic scratch
    with_labels = labels is not None
    tile_b = _pick_tile_b(B, H, L, with_labels=with_labels,
                          budget_bytes=picker_budget, max_tile=max_tile_b)
    n_tiles = _cdiv(B, tile_b)

    x = logits.astype(jnp.float32)
    w = weight_t.astype(jnp.float32)
    b2 = bias.astype(jnp.float32).reshape(1, L)

    x_spec = pl.BlockSpec((tile_b, H), lambda i: (i, 0))
    w_spec = pl.BlockSpec((H, L), lambda i: (0, 0))        # VMEM-resident
    b_spec = pl.BlockSpec((1, L), lambda i: (0, 0))        # VMEM-resident
    label_spec = pl.BlockSpec((tile_b, L), lambda i: (i, 0))
    sig_spec = pl.BlockSpec((tile_b, H), lambda i: (i, 0))

    compiler_params = pltpu.CompilerParams(
        # No cross-tile state on either path -> shard batch loop across TCs.
        dimension_semantics=("parallel",),
        vmem_limit_bytes=vmem_limit,
    )

    if with_labels:
        y = labels.astype(jnp.float32)
        cost = pl.CostEstimate(
            flops=2 * B * H * L,
            transcendentals=B * H + 2 * B * L,
            bytes_accessed=4 * (2 * B * H + 3 * B * L + H * L + L)
                           + n_tiles * 512,
        )
        kernel = functools.partial(_fused_loss_kernel, tile_b=tile_b, n_rows=B)
        label_logits, sig_logits, partials = pl.pallas_call(
            kernel,
            out_shape=(
                jax.ShapeDtypeStruct((B, L), jnp.float32),
                jax.ShapeDtypeStruct((B, H), jnp.float32),
                jax.ShapeDtypeStruct((n_tiles, 1, 128), jnp.float32),
            ),
            grid=(n_tiles,),
            in_specs=[x_spec, w_spec, b_spec,
                      pl.BlockSpec((tile_b, L), lambda i: (i, 0))],
            out_specs=(label_spec, sig_spec,
                       pl.BlockSpec((1, 1, 128), lambda i: (i, 0, 0))),
            compiler_params=compiler_params,
            cost_estimate=cost,
        )(x, w, b2, y)
        loss = jnp.sum(partials[:, 0, 0]) * (1.0 / float(B * L))
    else:
        cost = pl.CostEstimate(
            flops=2 * B * H * L,
            transcendentals=B * H,
            bytes_accessed=4 * (2 * B * H + B * L + H * L + L),
        )
        label_logits, sig_logits = pl.pallas_call(
            _fused_kernel,
            out_shape=(
                jax.ShapeDtypeStruct((B, L), jnp.float32),
                jax.ShapeDtypeStruct((B, H), jnp.float32),
            ),
            grid=(n_tiles,),
            in_specs=[x_spec, w_spec, b_spec],
            out_specs=(label_spec, sig_spec),
            compiler_params=compiler_params,
            cost_estimate=cost,
        )(x, w, b2)
        loss = None

    return loss, ier_layer, label_logits, sig_logits


if __name__ == "__main__":
    # Small shapes consistent with the module's forward:
    #   batch=8, hidden_size=32, num_labels=4
    B, H, L = 8, 32, 4
    key = jax.random.PRNGKey(0)
    k_logits, k_w, k_b, k_lab = jax.random.split(key, 4)

    # "logits" produced by the (stubbed) irl_model.
    logits = jax.random.normal(k_logits, (B, H), dtype=jnp.float32)

    # Deterministic nn.Linear(H, L) parameters (Kaiming-uniform style bound).
    bound = 1.0 / (H ** 0.5)
    weight = jax.random.uniform(k_w, (L, H), minval=-bound, maxval=bound,
                                dtype=jnp.float32)      # torch layout [L, H]
    bias = jax.random.uniform(k_b, (L,), minval=-bound, maxval=bound,
                              dtype=jnp.float32)
    weight_t = weight.T                                  # kernel layout [H, L]

    # Multi-hot labels for BCEWithLogitsLoss.
    labels = (jax.random.uniform(k_lab, (B, L)) > 0.5).astype(jnp.float32)

    # Opaque ier_layer passthrough.
    ier_layer = jnp.zeros((B, H), dtype=jnp.float32)

    loss, ier_out, label_logits, sig_logits = ptmf_linear_forward(
        logits, weight_t, bias, labels=labels, ier_layer=ier_layer)
    jax.block_until_ready((loss, label_logits, sig_logits))

    # Also exercise the labels=None path.
    loss_none, _, label_nl, sig_nl = ptmf_linear_forward(
        logits, weight_t, bias, labels=None, ier_layer=ier_layer)
    jax.block_until_ready((label_nl, sig_nl))

    # Reference check in plain JAX.
    sig_ref = jax.nn.sigmoid(logits)
    label_ref = sig_ref @ weight.T + bias
    per = (jnp.maximum(label_ref, 0) - label_ref * labels
           + jnp.log1p(jnp.exp(-jnp.abs(label_ref))))
    loss_ref = jnp.mean(per)

    assert jnp.allclose(sig_logits, sig_ref, atol=1e-5), "sigmoid mismatch"
    assert jnp.allclose(label_logits, label_ref, atol=1e-5), "linear mismatch"
    assert jnp.allclose(loss, loss_ref, atol=1e-5), "loss mismatch"
    assert loss_none is None
    assert jnp.allclose(label_nl, label_ref, atol=1e-5), "no-label linear mismatch"
    assert jnp.allclose(sig_nl, sig_ref, atol=1e-5), "no-label sigmoid mismatch"

    print("KERNEL_OK")
</pallas_src>

<mosaic_0001>
module attributes {stable_mosaic.version = 11 : i64} {
  func.func @_fused_loss_kernel(%arg0: i32, %arg1: memref<8x32xf32, #tpu.memory_space<vmem>>, %arg2: memref<32x4xf32, #tpu.memory_space<vmem>>, %arg3: memref<1x4xf32, #tpu.memory_space<vmem>>, %arg4: memref<8x4xf32, #tpu.memory_space<vmem>>, %arg5: memref<8x4xf32, #tpu.memory_space<vmem>>, %arg6: memref<8x32xf32, #tpu.memory_space<vmem>>, %arg7: memref<1x1x128xf32, #tpu.memory_space<vmem>>) attributes {dimension_semantics = [#tpu.dimension_semantics<parallel>], iteration_bounds = array<i64: 1>, scalar_prefetch = 0 : i64, scratch_operands = 0 : i64, tpu.core_type = #tpu.core_type<tc>, window_params = [{transform_indices = @transform_0, window_bounds = array<i64: 8, 32>}, {pipeline_mode = #tpu.pipeline_mode<synchronous>, transform_indices = @transform_1, window_bounds = array<i64: 32, 4>}, {pipeline_mode = #tpu.pipeline_mode<synchronous>, transform_indices = @transform_2, window_bounds = array<i64: 1, 4>}, {transform_indices = @transform_3, window_bounds = array<i64: 8, 4>}, {transform_indices = @transform_4, window_bounds = array<i64: 8, 4>}, {transform_indices = @transform_5, window_bounds = array<i64: 8, 32>}, {transform_indices = @transform_6, window_bounds = array<i64: 1, 1, 128>}]} {
    %c0 = arith.constant 0 : index
    %c0_0 = arith.constant 0 : index
    %0 = vector.load %arg1[%c0, %c0_0] : memref<8x32xf32, #tpu.memory_space<vmem>>, vector<8x32xf32>
    %1 = arith.negf %0 : vector<8x32xf32>
    %2 = math.exp %1 : vector<8x32xf32>
    %cst = arith.constant 1.000000e+00 : f32
    %3 = vector.broadcast %cst : f32 to vector<8x32xf32>
    %4 = arith.addf %3, %2 : vector<8x32xf32>
    %5 = arith.divf %3, %4 : vector<8x32xf32>
    %c0_1 = arith.constant 0 : index
    %c0_2 = arith.constant 0 : index
    %6 = vector.load %arg6[%c0_1, %c0_2] : memref<8x32xf32, #tpu.memory_space<vmem>>, vector<8x32xf32>
    tpu.vector_store %arg6[%c0_1, %c0_2], %5 {strides = array<i32>} : memref<8x32xf32, #tpu.memory_space<vmem>>, vector<8x32xf32>,
    %c0_3 = arith.constant 0 : index
    %c0_4 = arith.constant 0 : index
    %7 = vector.load %arg2[%c0_3, %c0_4] : memref<32x4xf32, #tpu.memory_space<vmem>>, vector<32x4xf32>
    %cst_5 = arith.constant dense<0.000000e+00> : vector<8x4xf32>
    %8 = tpu.matmul %5, %7, %cst_5 {dimension_numbers = #tpu.dot_dimension_numbers<[1], [0], [0], [1], [0, 0, 1, 1], [], []>} : vector<8x32xf32>, vector<32x4xf32>, vector<8x4xf32> -> vector<8x4xf32>
    %c0_6 = arith.constant 0 : index
    %c0_7 = arith.constant 0 : index
    %9 = vector.load %arg3[%c0_6, %c0_7] : memref<1x4xf32, #tpu.memory_space<vmem>>, vector<1x4xf32>
    %10 = vector.broadcast %9 : vector<1x4xf32> to vector<8x4xf32>
    %11 = arith.addf %8, %10 : vector<8x4xf32>
    %c0_8 = arith.constant 0 : index
    %c0_9 = arith.constant 0 : index
    %12 = vector.load %arg5[%c0_8, %c0_9] : memref<8x4xf32, #tpu.memory_space<vmem>>, vector<8x4xf32>
    tpu.vector_store %arg5[%c0_8, %c0_9], %11 {strides = array<i32>} : memref<8x4xf32, #tpu.memory_space<vmem>>, vector<8x4xf32>,
    %c0_10 = arith.constant 0 : index
    %c0_11 = arith.constant 0 : index
    %13 = vector.load %arg4[%c0_10, %c0_11] : memref<8x4xf32, #tpu.memory_space<vmem>>, vector<8x4xf32>
    %cst_12 = arith.constant 0.000000e+00 : f32
    %14 = vector.broadcast %cst_12 : f32 to vector<8x4xf32>
    %15 = arith.maximumf %11, %14 : vector<8x4xf32>
    %16 = arith.mulf %11, %13 : vector<8x4xf32>
    %17 = arith.subf %15, %16 : vector<8x4xf32>
    %18 = math.absf %11 : vector<8x4xf32>
    %cst_13 = arith.constant 0.000000e+00 : f32
    %19 = vector.broadcast %cst_13 : f32 to vector<8x4xf32>
    %20 = arith.subf %19, %18 : vector<8x4xf32>
    %21 = math.exp %20 : vector<8x4xf32>
    %22 = math.log1p %21 : vector<8x4xf32>
    %23 = arith.addf %17, %22 : vector<8x4xf32>
    %24 = tpu.iota {dimensions = array<i32: 0>} : vector<8x4xi32>
    %c8_i32 = arith.constant 8 : i32
    %25 = arith.muli %arg0, %c8_i32 : i32
    %26 = vector.broadcast %25 : i32 to vector<8x4xi32>
    %27 = arith.addi %24, %26 : vector<8x4xi32>
    %c8_i32_14 = arith.constant 8 : i32
    %28 = vector.broadcast %c8_i32_14 : i32 to vector<8x4xi32>
    %29 = arith.cmpi slt, %27, %28 : vector<8x4xi32>
    %cst_15 = arith.constant 0.000000e+00 : f32
    %30 = vector.broadcast %cst_15 : f32 to vector<8x4xf32>
    %31 = arith.select %29, %23, %30 : vector<8x4xi1>, vector<8x4xf32>
    %32 = vector.shape_cast %31 : vector<8x4xf32> to vector<1x8x4xf32>
    %cst_16 = arith.constant dense<0.000000e+00> : vector<1xf32>
    %33 = vector.multi_reduction <add>, %32, %cst_16 [1, 2] : vector<1x8x4xf32> to vector<1xf32>
    %34 = vector.shape_cast %33 : vector<1xf32> to vector<1x1x1xf32>
    %35 = vector.extract %34[0, 0, 0] : f32 from vector<1x1x1xf32>
    %36 = vector.broadcast %35 : f32 to vector<1x1x128xf32>
    %c0_17 = arith.constant 0 : index
    %c0_18 = arith.constant 0 : index
    %c0_19 = arith.constant 0 : index
    %37 = vector.load %arg7[%c0_17, %c0_18, %c0_19] : memref<1x1x128xf32, #tpu.memory_space<vmem>>, vector<1x1x128xf32>
    tpu.vector_store %arg7[%c0_17, %c0_18, %c0_19], %36 {strides = array<i32>} : memref<1x1x128xf32, #tpu.memory_space<vmem>>, vector<1x1x128xf32>,
    return
  }
  func.func @transform_0(%arg0: i32) -> (i32, i32) {
    %c0_i32 = arith.constant 0 : i32
    %c0_i32_0 = arith.constant 0 : i32
    return %arg0, %c0_i32 : i32, i32
  }
  func.func @transform_1(%arg0: i32) -> (i32, i32) {
    %c0_i32 = arith.constant 0 : i32
    %c0_i32_0 = arith.constant 0 : i32
    %c0_i32_1 = arith.constant 0 : i32
    return %c0_i32, %c0_i32_0 : i32, i32
  }
  func.func @transform_2(%arg0: i32) -> (i32, i32) {
    %c0_i32 = arith.constant 0 : i32
    %c0_i32_0 = arith.constant 0 : i32
    %c0_i32_1 = arith.constant 0 : i32
    return %c0_i32, %c0_i32_0 : i32, i32
  }
  func.func @transform_3(%arg0: i32) -> (i32, i32) {
    %c0_i32 = arith.constant 0 : i32
    %c0_i32_0 = arith.constant 0 : i32
    return %arg0, %c0_i32 : i32, i32
  }
  func.func @transform_4(%arg0: i32) -> (i32, i32) {
    %c0_i32 = arith.constant 0 : i32
    %c0_i32_0 = arith.constant 0 : i32
    return %arg0, %c0_i32 : i32, i32
  }
  func.func @transform_5(%arg0: i32) -> (i32, i32) {
    %c0_i32 = arith.constant 0 : i32
    %c0_i32_0 = arith.constant 0 : i32
    return %arg0, %c0_i32 : i32, i32
  }
  func.func @transform_6(%arg0: i32) -> (i32, i32, i32) {
    %c0_i32 = arith.constant 0 : i32
    %c0_i32_0 = arith.constant 0 : i32
    %c0_i32_1 = arith.constant 0 : i32
    return %arg0, %c0_i32, %c0_i32_0 : i32, i32, i32
  }
}

</mosaic_0001>

<llo_original>
// kernel: tpu_custom_call.1
$region0: #{tpu_custom_call.1}
  #allocation0 [shape = 'u32[]', space=smem, size = 0x4, offset = 0x4, fixed_abs, tag = 'smem constant byte address 0x4 - core index']
  #allocation1 [shape = 'u32[144,128]{1,0:T(1,128)}', space=vmem, size = 0x12000, scoped, tag = 'internal scratch']
  %s0 = inlined_call_operand.vmem [shape: f32[8,32], index: 0, kind: input, shape index: {}]
  %s1 = inlined_call_operand.vmem [shape: f32[32,4], index: 1, kind: input, shape index: {}]
  %s2 = inlined_call_operand.vmem [shape: f32[1,4], index: 2, kind: input, shape index: {}]
  %s3 = inlined_call_operand.vmem [shape: f32[8,4], index: 3, kind: input, shape index: {}]
  %s4 = inlined_call_operand.vmem [shape: f32[8,4], index: 4, kind: output, shape index: {0}]
  %s5 = inlined_call_operand.hbm [shape: f32[8,32], index: 5, kind: output, shape index: {1}]
  %s6 = inlined_call_operand.hbm [shape: f32[1,1,128], index: 6, kind: output, shape index: {2}]
  %7 = xla_tuple %s4, %s5, %s6
  %s8 = sld [smem:[#allocation0]]
  $region42: #{tpu_custom_call.1} parent=0
    _
  %s10 = ssub.s32 1, %s8
  %s11 = scalar_select 0, %s10, %s8
  $region1: #{tpu_custom_call.1} parent=0
    #allocation2 [shape = 'u8[4096]{0}', space=vmem, size = 0x1000, scoped, tag = 'output window, operand 1, single buffered']
    #allocation3 [shape = 's32[1]{0}', space=sflag, size = 0x4, scoped, tag = 'scoped memory for tpu_custom_call.1']
    #allocation4 [shape = 'u8[512]{0}', space=vmem, size = 0x400, scoped, tag = 'output window, operand 2, single buffered']
    #allocation5 [shape = 's32[1]{0}', space=sflag, size = 0x4, scoped, tag = 'scoped memory for tpu_custom_call.1']
    %12 = vsyncpa [#allocation3], 0
    %13 = vsyncpa [#allocation5], 0
    // Predicated region
    $region2: #{tpu_custom_call.1} parent=1 // pred_check
      _
    $region3: #{tpu_custom_call.1} parent=1 // pred_check_branch
      %15 = sbr.rel (0) target = $region5
    $region4: #{tpu_custom_call.1} parent=1 // pred_region
      _
    $region5: #{tpu_custom_call.1} parent=1 // pred_fallthru
      _
    // Predicated region
    $region6: #{tpu_custom_call.1} parent=1 // pred_check
      _
    $region7: #{tpu_custom_call.1} parent=1 // pred_check_branch
      %17 = sbr.rel (0) target = $region9
    $region8: #{tpu_custom_call.1} parent=1 // pred_region
      _
    $region9: #{tpu_custom_call.1} parent=1 // pred_fallthru
      _
    // Predicated region
    $region10: #{tpu_custom_call.1} parent=1 // pred_check
      _
    $region11: #{tpu_custom_call.1} parent=1 // pred_check_branch
      %19 = sbr.rel (0) target = $region13
    $region12: #{tpu_custom_call.1} parent=1 // pred_region
      _
    $region13: #{tpu_custom_call.1} parent=1 // pred_fallthru
      _
    // Predicated region
    $region14: #{tpu_custom_call.1} parent=1 // pred_check
      _
    $region15: #{tpu_custom_call.1} parent=1 // pred_check_branch
      %21 = sbr.rel (0) target = $region17
    $region16: #{tpu_custom_call.1} parent=1 // pred_region
      _
    $region17: #{tpu_custom_call.1} parent=1 // pred_fallthru
      _
    %v22 = vld [vmem:[%s0] sm:$0xff]
    %v23 = vxor.u32 %v22, 2147483648
    %v24 = vmul.f32 %v23, 1.442695
    %v25 = vpow.pop %v24
    %v26 = vadd.f32 %v25, 1.0
    %v27 = vrcp.pop %v26
    %v28 = vmul.f32 1.0, %v27
    %vm29 = vcmask 261120
    %30 = vst.msk [vmem:[#allocation2] sm:$0xff] %vm29, %v28
    %v31 = vld [vmem:[%s1] sm:$0xff]
    %v32 = vld [vmem:[%s1 + $0x8] sm:$0xff]
    %v33 = vld [vmem:[%s1 + $0x10] sm:$0xff]
    %v34 = vld [vmem:[%s1 + $0x18] sm:$0xff]
    %v35 = vld [vmem:[%s2] sm:$0x1]
    %v37 = vlaneseq
    %v38 = vshrl.u32 %v37, 7
    %v39 = vsub.s32 0, %v38
    %v40 = vrot.slane %v35, %v39
    %v43 = vsel %vm29, %v28, 0
    %45 = vmatprep.subr.mxu0 0.0
    %46 = vmatpush1.msra.mxu0 0.0
    %47 = vmatprep.subr.mxu0 0.0
    %48 = vmatpush1.msra.mxu0 0.0
    %49 = vmatprep.subr.mxu0 0.0
    %50 = vmatpush1.msra.mxu0 0.0
    %51 = vmatprep.subr.mxu0 0.0
    %52 = vmatpush1.msra.mxu0 0.0
    %53 = vmatprep.subr.mxu0 0.0
    %54 = vmatpush1.msra.mxu0 0.0
    %55 = vmatprep.subr.mxu0 0.0
    %56 = vmatpush1.msra.mxu0 0.0
    %57 = vmatprep.subr.mxu0 0.0
    %58 = vmatpush1.msra.mxu0 0.0
    %59 = vmatprep.subr.mxu0 0.0
    %60 = vmatpush1.msra.mxu0 0.0
    %61 = vmatprep.subr.mxu0 0.0
    %62 = vmatpush1.msra.mxu0 0.0
    %63 = vmatprep.subr.mxu0 0.0
    %64 = vmatpush1.msra.mxu0 0.0
    %65 = vmatprep.subr.mxu0 0.0
    %66 = vmatpush1.msra.mxu0 0.0
    %67 = vmatprep.subr.mxu0 0.0
    %68 = vmatpush1.msra.mxu0 0.0
    %69 = vmatprep.subr.mxu0 0.0
    %70 = vmatpush1.msra.mxu0 %v34
    %71 = vmatprep.subr.mxu0 0.0
    %72 = vmatpush1.msra.mxu0 %v33
    %73 = vmatprep.subr.mxu0 0.0
    %74 = vmatpush1.msra.mxu0 %v32
    %75 = vmatprep.subr.mxu0 0.0
    %76 = vmatpush1.msra.mxu0 %v31
    %77 = vmatprep.subr.mxu0 0.0
    %78 = vmatpush2.msra.mxu0 0.0
    %79 = vmatprep.subr.mxu0 0.0
    %80 = vmatpush2.msra.mxu0 0.0
    %81 = vmatprep.subr.mxu0 0.0
    %82 = vmatpush2.msra.mxu0 0.0
    %83 = vmatprep.subr.mxu0 0.0
    %84 = vmatpush2.msra.mxu0 0.0
    %85 = vmatprep.subr.mxu0 0.0
    %86 = vmatpush2.msra.mxu0 0.0
    %87 = vmatprep.subr.mxu0 0.0
    %88 = vmatpush2.msra.mxu0 0.0
    %89 = vmatprep.subr.mxu0 0.0
    %90 = vmatpush2.msra.mxu0 0.0
    %91 = vmatprep.subr.mxu0 0.0
    %92 = vmatpush2.msra.mxu0 0.0
    %93 = vmatprep.subr.mxu0 0.0
    %94 = vmatpush2.msra.mxu0 0.0
    %95 = vmatprep.subr.mxu0 0.0
    %96 = vmatpush2.msra.mxu0 0.0
    %97 = vmatprep.subr.mxu0 0.0
    %98 = vmatpush2.msra.mxu0 0.0
    %99 = vmatprep.subr.mxu0 0.0
    %100 = vmatpush2.msra.mxu0 0.0
    %101 = vmatprep.subr.mxu0 0.0
    %102 = vmatpush2.msra.mxu0 0.0
    %103 = vmatprep.subr.mxu0 0.0
    %104 = vmatpush2.msra.mxu0 0.0
    %105 = vmatprep.subr.mxu0 0.0
    %106 = vmatpush2.msra.mxu0 0.0
    %107 = vmatprep.subr.mxu0 0.0
    %108 = vmatpush2.msra.mxu0 0.0
    %109 = vmatprep.mubr.f32.mxu0 0.0
    %110 = vmatmul.mubr.f32.gmra.mxu0 %v43
    %v111 = vpop.f32.mrf.mxu0
    %v112 = vadd.f32 %v40, %v111
    %v113 = vpop.f32.mrf.mxu0
    %114 = vdwg.mxu0
    %vm115 = vcmask 31744
    %116 = vst.msk [vmem:[%s4] sm:$0xff] %vm115, %v112
    %v117 = vld [vmem:[%s3] sm:$0xff]
    %v118 = vmax.f32 %v112, 0.0
    %v119 = vmul.f32 %v112, %v117
    %v120 = vsub.f32 %v118, %v119
    %v121 = vand.u32 2147483647, %v112
    %v122 = vsub.f32 0.0, %v121
    %v123 = vmul.f32 %v122, 1.442695
    %v124 = vpow.pop %v123
    %v125 = vadd.f32 %v124, 1.0
    %v126 = vlog2.pop %v125
    %v127 = vmul.f32 %v126, 0.6931472
    %v128 = vmul.f32 -0.5, %v124
    %v129 = vadd.f32 %v128, 1.0
    %v130 = vmul.f32 %v129, %v124
    %v131 = vand.u32 2147483647, %v124
    %vm132 = vcmp.lt.f32.partialorder %v131, 0.0004427343
    %v133 = vsel %vm132, %v130, %v127
    %v134 = vadd.f32 %v120, %v133
    %v135 = vlaneseq
    %v136 = vshrl.u32 %v135, 7
    %s137 = smul.u32 0, 8
    %v138 = vstv %s137
    %v139 = vadd.s32 %v136, %v138
    %vm140 = vcmp.lt.s32.totalorder %v139, 8
    %v141 = vsel %vm140, %v134, 0.0
    %v142 = vsel %vm115, %v141, 0.0
    %143 = vadd.xlane.f32.xlu0 %v142
    %v144 = vpop.xlane.xlu0 %143
    %v145 = vrot.slane %v144, 4
    %v146 = vadd.f32 %v144, %v145
    %v147 = vrot.slane %v146, 2
    %v148 = vadd.f32 %v146, %v147
    %v149 = vrot.slane %v148, 1
    %v150 = vadd.f32 %v148, %v149
    %s151 = vtos %v150
    %v152 = vstv %s151
    %153 = vst [vmem:[#allocation4] sm:$0x1] %v152
    // Predicated region
    $region18: #{tpu_custom_call.1} parent=1 // pred_check
      _
    $region19: #{tpu_custom_call.1} parent=1 // pred_check_branch
      %155 = sbr.rel (0) target = $region21
    $region20: #{tpu_custom_call.1} parent=1 // pred_region
      _
    $region21: #{tpu_custom_call.1} parent=1 // pred_fallthru
      _
    // Predicated region
    $region22: #{tpu_custom_call.1} parent=1 // pred_check
      _
    $region23: #{tpu_custom_call.1} parent=1 // pred_check_branch
      %157 = sbr.rel (0) target = $region25
    $region24: #{tpu_custom_call.1} parent=1 // pred_region
      %s159 = ssub.s32 128, 128
      %160 = vsyncadd [#allocation3], %s159
      %s162 = sshll.u32 [#allocation2], 4
      %s163 = int_to_ptr.vmem [resolvable:$true] %s162
      %165 = dma.vmem_to_hbm [thread:$0]  %s163, 128, %s5, [#allocation3]
    $region25: #{tpu_custom_call.1} parent=1 // pred_fallthru
      _
    // Predicated region
    $region26: #{tpu_custom_call.1} parent=1 // pred_check
      _
    $region27: #{tpu_custom_call.1} parent=1 // pred_check_branch
      %167 = sbr.rel (0) target = $region29
    $region28: #{tpu_custom_call.1} parent=1 // pred_region
      %s169 = ssub.s32 16, 16
      %170 = vsyncadd [#allocation5], %s169
      %s172 = sshll.u32 [#allocation4], 4
      %s173 = int_to_ptr.vmem [resolvable:$true] %s172
      %175 = dma.vmem_to_hbm [thread:$0]  %s173, 16, %s6, [#allocation5]
    $region29: #{tpu_custom_call.1} parent=1 // pred_fallthru
      _
    // Predicated region
    $region30: #{tpu_custom_call.1} parent=1 // pred_check
      _
    $region31: #{tpu_custom_call.1} parent=1 // pred_check_branch
      %177 = sbr.rel (0) target = $region33
    $region32: #{tpu_custom_call.1} parent=1 // pred_region
      _
    $region33: #{tpu_custom_call.1} parent=1 // pred_fallthru
      _
    // Predicated region
    $region34: #{tpu_custom_call.1} parent=1 // pred_check
      _
    $region35: #{tpu_custom_call.1} parent=1 // pred_check_branch
      %179 = sbr.rel (0) target = $region37
    $region36: #{tpu_custom_call.1} parent=1 // pred_region
      %180 = dma.done [#allocation3], 128
    $region37: #{tpu_custom_call.1} parent=1 // pred_fallthru
      _
    // Predicated region
    $region38: #{tpu_custom_call.1} parent=1 // pred_check
      _
    $region39: #{tpu_custom_call.1} parent=1 // pred_check_branch
      %182 = sbr.rel (0) target = $region41
    $region40: #{tpu_custom_call.1} parent=1 // pred_region
      %183 = dma.done [#allocation5], 16
    $region41: #{tpu_custom_call.1} parent=1 // pred_fallthru
      _
    %184 = vsyncpa [#allocation3], 1
    %185 = vsyncpa [#allocation5], 1

</llo_original>
